<compile_context>
chip_gen: v7x
topology: tpu7x:2x2x1
jax: 0.10.0
libtpu: 0.0.40
codegen_flags: <defaults>
</compile_context>

<pallas_src>
import functools

import jax
import jax.numpy as jnp
from jax.experimental import pallas as pl
from jax.experimental.pallas import tpu as pltpu

# KD_loss hyper-parameters (module defaults)
ALPHA = 0.5
BETA = 1.0
# TODO(synk): exact PearFace margin formula & FocalLoss gamma unavailable in the source;
#             a CosFace-style margin head (s=64, m=0.35) and focal loss (gamma=2) are used.
PEARFACE_S = 64.0
PEARFACE_M = 0.35
_SM = PEARFACE_S * PEARFACE_M
_NEG_INF = -1e30          # finite "masked" logit (avoids inf-inf NaNs in the LSE combine)

# --- tiling defaults ---------------------------------------------------------------
# Class-tile width.  Per-tile weight DMA = E*TILE_C*2 B; double-buffered that is 8 MiB
# at E=512 / TILE_C=4096 -- comfortably inside the 48 MiB scoped-VMEM budget below on
# every generation (v7x: 64 MiB physical VMEM, v5e/v6e: 128 MiB).  Big tiles amortise
# the ~0.35 us per-grid-step overhead (128-wide tiles ran at ~30% of HBM roofline).
# Sweep 1024-8192 per chip; raise VMEM_LIMIT_BYTES together with TILE_C_MAX on v6e.
TILE_C_MAX = 4096
# Class-range splits on the "parallel" grid axis: 2 keeps both TensorCores busy on
# dual-TC chips (v7x); it degenerates to a pure sequential loop on 1-TC v5e/v6e.
NUM_CLASS_SPLITS = 2
VMEM_LIMIT_BYTES = 48 * 1024 * 1024


def _kd_class_tile_kernel(s_ref, inv_sn_ref, labels_ref, w_ref, scale_ref, bias_ref,
                          m_out, l_out, t_out, m_scr, l_scr, tgt_scr):
    """One (split, class-tile) grid step of the PearFace head.

    Maintains an online logsumexp (m, l) and the target logit over the class tiles of
    this split; emits the per-row partials on the split's last tile.
    """
    c = pl.program_id(1)
    n_c = pl.num_programs(1)

    @pl.when(c == 0)
    def _init():
        m_scr[...] = jnp.full_like(m_scr, -jnp.inf)
        l_scr[...] = jnp.zeros_like(l_scr)
        tgt_scr[...] = jnp.zeros_like(tgt_scr)

    # bf16 MXU matmul of the *unnormalised* student against the raw bf16 weight tile;
    # all normalisation (1/||s||, S/||w_c||) is applied as cheap post-matmul scales.
    cos_raw = jnp.dot(s_ref[...], w_ref[...],
                      preferred_element_type=jnp.float32)            # (B, TILE_C) f32

    # thetas = S * (cos(theta) - M * onehot(label)); padded class columns carry a
    # precomputed -1e30 bias (and zero scale), so no per-tile validity compare is needed.
    thetas = cos_raw * (inv_sn_ref[...] * scale_ref[...]) + bias_ref[...]

    b, tc = thetas.shape
    tile_idx = pl.program_id(0) * n_c + c
    class_ids = tile_idx * tc + jax.lax.broadcasted_iota(jnp.int32, (b, tc), 1)
    is_target = class_ids == labels_ref[...]                         # (B, TILE_C)
    thetas = thetas - jnp.where(is_target, _SM, 0.0)

    # ---- online logsumexp + target-logit gather across this split's class tiles ----
    m_prev = m_scr[...]
    m_new = jnp.maximum(m_prev, jnp.max(thetas, axis=1, keepdims=True))
    l_scr[...] = (l_scr[...] * jnp.exp(m_prev - m_new)
                  + jnp.sum(jnp.exp(thetas - m_new), axis=1, keepdims=True))
    m_scr[...] = m_new
    tgt_scr[...] += jnp.sum(jnp.where(is_target, thetas, 0.0), axis=1, keepdims=True)

    # NOTE: thetas_tea / thetas_stu in the reference forward are computed but never
    # used -> skipped.

    @pl.when(c == n_c - 1)
    def _finalize():
        m_out[0] = m_scr[...]
        l_out[0] = l_scr[...]
        t_out[0] = tgt_scr[...]


def _round_up(x, m):
    return -(-x // m) * m


def choose_class_tiling(num_classes, max_tile_c=TILE_C_MAX, max_splits=NUM_CLASS_SPLITS):
    tile_c = min(max_tile_c, _round_up(num_classes, 128))
    n_tiles = -(-num_classes // tile_c)
    num_splits = max_splits if n_tiles >= max_splits else 1
    tiles_per_split = -(-n_tiles // num_splits)
    c_pad = num_splits * tiles_per_split * tile_c
    return tile_c, num_splits, c_pad


def prepare_pearface_weight(weight, max_tile_c=TILE_C_MAX, max_splits=NUM_CLASS_SPLITS):
    """One-time preparation of the PearFace classifier (per weight update, NOT per
    forward call): bf16 cast + class-axis pad, plus per-class scale S/||w_c|| computed
    from the *same* bf16 weight the MXU sees (self-consistent cosine) and the padding
    bias.  This removes the per-call f32->bf16 weight materialisation and the in-kernel
    per-tile column-norm reduction entirely."""
    _, C = weight.shape
    tile_c, num_splits, c_pad = choose_class_tiling(C, max_tile_c, max_splits)

    w_bf16 = weight.astype(jnp.bfloat16)
    if c_pad != C:
        w_bf16 = jnp.pad(w_bf16, ((0, 0), (0, c_pad - C)))
    w32 = w_bf16.astype(jnp.float32)
    col_nsq = jnp.sum(w32 * w32, axis=0, keepdims=True)                  # (1, c_pad)
    valid = (jnp.arange(c_pad) < C)[None, :]
    col_scale = jnp.where(valid, PEARFACE_S * jax.lax.rsqrt(col_nsq + 1e-12),
                          0.0).astype(jnp.float32)
    col_bias = jnp.where(valid, 0.0, _NEG_INF).astype(jnp.float32)
    return w_bf16, col_scale, col_bias, tile_c, num_splits


@functools.partial(jax.jit, static_argnames=("tile_c", "num_splits"))
def kd_loss_forward(teacher_outputs, student_outputs, labels,
                    w_bf16, col_scale, col_bias, *, tile_c, num_splits):
    """Returns (kd_loss, hard_loss, soft_loss) scalars, matching KD_loss.forward."""
    B, E = student_outputs.shape
    c_pad = w_bf16.shape[1]
    tiles_per_split = c_pad // (num_splits * tile_c)

    # Student cast to bf16 once (MXU dtype); 1/||s|| comes from the same bf16-rounded
    # values the matmul sees so the post-matmul cosine is self-consistent.
    s_bf = student_outputs.astype(jnp.bfloat16)
    s32 = s_bf.astype(jnp.float32)
    inv_sn = jax.lax.rsqrt(jnp.sum(s32 * s32, axis=1, keepdims=True) + 1e-12)
    labels2d = labels.reshape(B, 1).astype(jnp.int32)

    wcol = lambda p, c: (0, p * tiles_per_split + c)
    part_shape = jax.ShapeDtypeStruct((num_splits, B, 1), jnp.float32)

    def _part_spec():
        return pl.BlockSpec((1, B, 1), lambda p, c: (p, 0, 0))

    m_p, l_p, t_p = pl.pallas_call(
        _kd_class_tile_kernel,
        out_shape=(part_shape, part_shape, part_shape),
        grid_spec=pltpu.PrefetchScalarGridSpec(
            num_scalar_prefetch=0,
            grid=(num_splits, tiles_per_split),
            in_specs=[
                pl.BlockSpec((B, E), lambda p, c: (0, 0)),     # student bf16 (resident)
                pl.BlockSpec((B, 1), lambda p, c: (0, 0)),     # 1/||s||     (resident)
                pl.BlockSpec((B, 1), lambda p, c: (0, 0)),     # labels      (resident)
                pl.BlockSpec((E, tile_c), wcol),               # weight tile (streamed)
                pl.BlockSpec((1, tile_c), wcol),               # S/||w_c||   (streamed)
                pl.BlockSpec((1, tile_c), wcol),               # padding bias(streamed)
            ],
            out_specs=(_part_spec(), _part_spec(), _part_spec()),
            scratch_shapes=[
                pltpu.VMEM((B, 1), jnp.float32),   # running max
                pltpu.VMEM((B, 1), jnp.float32),   # running sum-exp
                pltpu.VMEM((B, 1), jnp.float32),   # target logit
            ],
        ),
        compiler_params=pltpu.CompilerParams(
            # split axis shards across TensorCores (v7x); class-tile axis carries the
            # online-LSE accumulator.
            dimension_semantics=("parallel", "arbitrary"),
            vmem_limit_bytes=VMEM_LIMIT_BYTES,
        ),
    )(s_bf, inv_sn, labels2d, w_bf16, col_scale, col_bias)

    # ---- tiny per-split LSE combine + FocalLoss in plain XLA (O(num_splits*B)) ----
    m_p, l_p, t_p = m_p[:, :, 0], l_p[:, :, 0], t_p[:, :, 0]       # each (P, B)
    m = jnp.max(m_p, axis=0)                                       # (B,)
    l = jnp.sum(l_p * jnp.exp(m_p - m[None, :]), axis=0)           # (B,)
    tgt = jnp.sum(t_p, axis=0)                                     # (B,)
    logp_t = tgt - (m + jnp.log(l))
    p_t = jnp.exp(logp_t)
    om = 1.0 - p_t
    cls_loss = jnp.mean(-(om * om) * logp_t)                       # FocalLoss, gamma=2

    # ---- soft loss: cosine(normalize(student), normalize(teacher)), plain XLA ----
    # O(B*E) and independent of the class loop -> kept out of the kernel on purpose.
    sf = student_outputs.astype(jnp.float32)
    tf = teacher_outputs.astype(jnp.float32)
    inv_s = jax.lax.rsqrt(jnp.sum(sf * sf, axis=1) + 1e-12)
    inv_t = jax.lax.rsqrt(jnp.sum(tf * tf, axis=1) + 1e-12)
    cos_st = jnp.sum(sf * tf, axis=1) * inv_s * inv_t
    soft_loss = jnp.mean(1.0 - cos_st)

    kd_loss = ALPHA * cls_loss + BETA * soft_loss
    return kd_loss, cls_loss, soft_loss


if __name__ == "__main__":
    key = jax.random.PRNGKey(0)
    B, E, C = 8, 512, 1000   # batch, embedding_size (module default 512), class_num

    k1, k2, k3, k4 = jax.random.split(key, 4)
    teacher_outputs = jax.random.normal(k1, (B, E), jnp.float32)
    student_outputs = jax.random.normal(k2, (B, E), jnp.float32)
    labels = jax.random.randint(k3, (B,), 0, C, dtype=jnp.int32)
    # Deterministic synthetic PearFace weight matrix (E, C) - not a checkpoint load.
    pearface_weight = jax.random.normal(k4, (E, C), jnp.float32) * 0.01

    # Small class tile for the demo so the multi-tile / two-split grid path (online
    # LSE + padding + parallel split) is exercised; production uses TILE_C_MAX (4096).
    w_bf16, col_scale, col_bias, tile_c, num_splits = prepare_pearface_weight(
        pearface_weight, max_tile_c=256)

    kd, hard, soft = kd_loss_forward(teacher_outputs, student_outputs, labels,
                                     w_bf16, col_scale, col_bias,
                                     tile_c=tile_c, num_splits=num_splits)
    jax.block_until_ready((kd, hard, soft))
    print("KERNEL_OK")
</pallas_src>

<mosaic_0001>
module attributes {stable_mosaic.version = 11 : i64} {
  func.func @_kd_class_tile_kernel(%arg0: i32, %arg1: i32, %arg2: memref<8x512xbf16, #tpu.memory_space<vmem>>, %arg3: memref<8x1xf32, #tpu.memory_space<vmem>>, %arg4: memref<8x1xi32, #tpu.memory_space<vmem>>, %arg5: memref<512x256xbf16, #tpu.memory_space<vmem>>, %arg6: memref<1x256xf32, #tpu.memory_space<vmem>>, %arg7: memref<1x256xf32, #tpu.memory_space<vmem>>, %arg8: memref<1x8x1xf32, #tpu.memory_space<vmem>>, %arg9: memref<1x8x1xf32, #tpu.memory_space<vmem>>, %arg10: memref<1x8x1xf32, #tpu.memory_space<vmem>>, %arg11: memref<8x1xf32, #tpu.memory_space<vmem>>, %arg12: memref<8x1xf32, #tpu.memory_space<vmem>>, %arg13: memref<8x1xf32, #tpu.memory_space<vmem>>) attributes {dimension_semantics = [#tpu.dimension_semantics<parallel>, #tpu.dimension_semantics<arbitrary>], iteration_bounds = array<i64: 2, 2>, scalar_prefetch = 0 : i64, scratch_operands = 3 : i64, tpu.core_type = #tpu.core_type<tc>, window_params = [{pipeline_mode = #tpu.pipeline_mode<synchronous>, transform_indices = @transform_0, window_bounds = array<i64: 8, 512>}, {pipeline_mode = #tpu.pipeline_mode<synchronous>, transform_indices = @transform_1, window_bounds = array<i64: 8, 1>}, {pipeline_mode = #tpu.pipeline_mode<synchronous>, transform_indices = @transform_2, window_bounds = array<i64: 8, 1>}, {transform_indices = @transform_3, window_bounds = array<i64: 512, 256>}, {transform_indices = @transform_4, window_bounds = array<i64: 1, 256>}, {transform_indices = @transform_5, window_bounds = array<i64: 1, 256>}, {transform_indices = @transform_6, window_bounds = array<i64: 1, 8, 1>}, {transform_indices = @transform_7, window_bounds = array<i64: 1, 8, 1>}, {transform_indices = @transform_8, window_bounds = array<i64: 1, 8, 1>}]} {
    %c0_i32 = arith.constant 0 : i32
    %0 = arith.cmpi eq, %arg1, %c0_i32 : i32
    %1 = arith.extui %0 : i1 to i32
    %c0_i32_0 = arith.constant 0 : i32
    %2 = arith.cmpi ne, %1, %c0_i32_0 : i32
    scf.if %2 {
      %cst_31 = arith.constant 0xFF800000 : f32
      %54 = vector.broadcast %cst_31 : f32 to vector<8x1xf32>
      %c0_32 = arith.constant 0 : index
      %c0_33 = arith.constant 0 : index
      %55 = vector.load %arg11[%c0_32, %c0_33] : memref<8x1xf32, #tpu.memory_space<vmem>>, vector<8x1xf32>
      tpu.vector_store %arg11[%c0_32, %c0_33], %54 {strides = array<i32>} : memref<8x1xf32, #tpu.memory_space<vmem>>, vector<8x1xf32>,
      %cst_34 = arith.constant 0.000000e+00 : f32
      %56 = vector.broadcast %cst_34 : f32 to vector<8x1xf32>
      %c0_35 = arith.constant 0 : index
      %c0_36 = arith.constant 0 : index
      %57 = vector.load %arg12[%c0_35, %c0_36] : memref<8x1xf32, #tpu.memory_space<vmem>>, vector<8x1xf32>
      tpu.vector_store %arg12[%c0_35, %c0_36], %56 {strides = array<i32>} : memref<8x1xf32, #tpu.memory_space<vmem>>, vector<8x1xf32>,
      %cst_37 = arith.constant 0.000000e+00 : f32
      %58 = vector.broadcast %cst_37 : f32 to vector<8x1xf32>
      %c0_38 = arith.constant 0 : index
      %c0_39 = arith.constant 0 : index
      %59 = vector.load %arg13[%c0_38, %c0_39] : memref<8x1xf32, #tpu.memory_space<vmem>>, vector<8x1xf32>
      tpu.vector_store %arg13[%c0_38, %c0_39], %58 {strides = array<i32>} : memref<8x1xf32, #tpu.memory_space<vmem>>, vector<8x1xf32>,
    } else {
    }
    %c0 = arith.constant 0 : index
    %c0_1 = arith.constant 0 : index
    %3 = vector.load %arg2[%c0, %c0_1] : memref<8x512xbf16, #tpu.memory_space<vmem>>, vector<8x512xbf16>
    %c0_2 = arith.constant 0 : index
    %c0_3 = arith.constant 0 : index
    %4 = vector.load %arg5[%c0_2, %c0_3] : memref<512x256xbf16, #tpu.memory_space<vmem>>, vector<512x256xbf16>
    %cst = arith.constant dense<0.000000e+00> : vector<8x256xf32>
    %5 = tpu.matmul %3, %4, %cst {dimension_numbers = #tpu.dot_dimension_numbers<[1], [0], [0], [1], [0, 0, 1, 1], [], []>} : vector<8x512xbf16>, vector<512x256xbf16>, vector<8x256xf32> -> vector<8x256xf32>
    %c0_4 = arith.constant 0 : index
    %c0_5 = arith.constant 0 : index
    %6 = vector.load %arg3[%c0_4, %c0_5] : memref<8x1xf32, #tpu.memory_space<vmem>>, vector<8x1xf32>
    %c0_6 = arith.constant 0 : index
    %c0_7 = arith.constant 0 : index
    %7 = vector.load %arg6[%c0_6, %c0_7] : memref<1x256xf32, #tpu.memory_space<vmem>>, vector<1x256xf32>
    %8 = vector.broadcast %6 : vector<8x1xf32> to vector<8x256xf32>
    %9 = vector.broadcast %7 : vector<1x256xf32> to vector<8x256xf32>
    %10 = arith.mulf %8, %9 : vector<8x256xf32>
    %11 = arith.mulf %5, %10 : vector<8x256xf32>
    %c0_8 = arith.constant 0 : index
    %c0_9 = arith.constant 0 : index
    %12 = vector.load %arg7[%c0_8, %c0_9] : memref<1x256xf32, #tpu.memory_space<vmem>>, vector<1x256xf32>
    %13 = vector.broadcast %12 : vector<1x256xf32> to vector<8x256xf32>
    %14 = arith.addf %11, %13 : vector<8x256xf32>
    %c2_i32 = arith.constant 2 : i32
    %15 = arith.muli %arg0, %c2_i32 : i32
    %16 = arith.addi %15, %arg1 : i32
    %c256_i32 = arith.constant 256 : i32
    %17 = arith.muli %16, %c256_i32 : i32
    %18 = tpu.iota {dimensions = array<i32: 1>} : vector<8x256xi32>
    %19 = vector.broadcast %17 : i32 to vector<8x256xi32>
    %20 = arith.addi %19, %18 : vector<8x256xi32>
    %c0_10 = arith.constant 0 : index
    %c0_11 = arith.constant 0 : index
    %21 = vector.load %arg4[%c0_10, %c0_11] : memref<8x1xi32, #tpu.memory_space<vmem>>, vector<8x1xi32>
    %22 = vector.broadcast %21 : vector<8x1xi32> to vector<8x256xi32>
    %23 = arith.cmpi eq, %20, %22 : vector<8x256xi32>
    %cst_12 = arith.constant 2.240000e+01 : f32
    %cst_13 = arith.constant 0.000000e+00 : f32
    %24 = vector.broadcast %cst_12 : f32 to vector<8x256xf32>
    %25 = vector.broadcast %cst_13 : f32 to vector<8x256xf32>
    %26 = arith.select %23, %24, %25 : vector<8x256xi1>, vector<8x256xf32>
    %27 = arith.subf %14, %26 : vector<8x256xf32>
    %c0_14 = arith.constant 0 : index
    %c0_15 = arith.constant 0 : index
    %28 = vector.load %arg11[%c0_14, %c0_15] : memref<8x1xf32, #tpu.memory_space<vmem>>, vector<8x1xf32>
    %cst_16 = arith.constant dense<0xFF800000> : vector<8xf32>
    %29 = vector.multi_reduction <maximumf>, %27, %cst_16 [1] : vector<8x256xf32> to vector<8xf32>
    %30 = vector.shape_cast %29 : vector<8xf32> to vector<8x1xf32>
    %31 = arith.maximumf %28, %30 : vector<8x1xf32>
    %c0_17 = arith.constant 0 : index
    %c0_18 = arith.constant 0 : index
    %32 = vector.load %arg12[%c0_17, %c0_18] : memref<8x1xf32, #tpu.memory_space<vmem>>, vector<8x1xf32>
    %33 = arith.subf %28, %31 : vector<8x1xf32>
    %34 = math.exp %33 : vector<8x1xf32>
    %35 = arith.mulf %32, %34 : vector<8x1xf32>
    %36 = vector.broadcast %31 : vector<8x1xf32> to vector<8x256xf32>
    %37 = arith.subf %27, %36 : vector<8x256xf32>
    %38 = math.exp %37 : vector<8x256xf32>
    %cst_19 = arith.constant dense<0.000000e+00> : vector<8xf32>
    %39 = vector.multi_reduction <add>, %38, %cst_19 [1] : vector<8x256xf32> to vector<8xf32>
    %40 = vector.shape_cast %39 : vector<8xf32> to vector<8x1xf32>
    %41 = arith.addf %35, %40 : vector<8x1xf32>
    %c0_20 = arith.constant 0 : index
    %c0_21 = arith.constant 0 : index
    %42 = vector.load %arg12[%c0_20, %c0_21] : memref<8x1xf32, #tpu.memory_space<vmem>>, vector<8x1xf32>
    tpu.vector_store %arg12[%c0_20, %c0_21], %41 {strides = array<i32>} : memref<8x1xf32, #tpu.memory_space<vmem>>, vector<8x1xf32>,
    %c0_22 = arith.constant 0 : index
    %c0_23 = arith.constant 0 : index
    %43 = vector.load %arg11[%c0_22, %c0_23] : memref<8x1xf32, #tpu.memory_space<vmem>>, vector<8x1xf32>
    tpu.vector_store %arg11[%c0_22, %c0_23], %31 {strides = array<i32>} : memref<8x1xf32, #tpu.memory_space<vmem>>, vector<8x1xf32>,
    %c0_24 = arith.constant 0 : index
    %c0_25 = arith.constant 0 : index
    %44 = vector.load %arg13[%c0_24, %c0_25] : memref<8x1xf32, #tpu.memory_space<vmem>>, vector<8x1xf32>
    %cst_26 = arith.constant 0.000000e+00 : f32
    %45 = vector.broadcast %cst_26 : f32 to vector<8x256xf32>
    %46 = arith.select %23, %27, %45 : vector<8x256xi1>, vector<8x256xf32>
    %cst_27 = arith.constant dense<0.000000e+00> : vector<8xf32>
    %47 = vector.multi_reduction <add>, %46, %cst_27 [1] : vector<8x256xf32> to vector<8xf32>
    %48 = vector.shape_cast %47 : vector<8xf32> to vector<8x1xf32>
    %49 = arith.addf %44, %48 : vector<8x1xf32>
    %c0_28 = arith.constant 0 : index
    %c0_29 = arith.constant 0 : index
    %50 = vector.load %arg13[%c0_28, %c0_29] : memref<8x1xf32, #tpu.memory_space<vmem>>, vector<8x1xf32>
    tpu.vector_store %arg13[%c0_28, %c0_29], %49 {strides = array<i32>} : memref<8x1xf32, #tpu.memory_space<vmem>>, vector<8x1xf32>,
    %c1_i32 = arith.constant 1 : i32
    %51 = arith.cmpi eq, %arg1, %c1_i32 : i32
    %52 = arith.extui %51 : i1 to i32
    %c0_i32_30 = arith.constant 0 : i32
    %53 = arith.cmpi ne, %52, %c0_i32_30 : i32
    scf.if %53 {
      %c0_31 = arith.constant 0 : index
      %c0_32 = arith.constant 0 : index
      %54 = vector.load %arg11[%c0_31, %c0_32] : memref<8x1xf32, #tpu.memory_space<vmem>>, vector<8x1xf32>
      %c0_33 = arith.constant 0 : index
      %c0_34 = arith.constant 0 : index
      %c0_35 = arith.constant 0 : index
      %55 = vector.load %arg8[%c0_33, %c0_34, %c0_35] : memref<1x8x1xf32, #tpu.memory_space<vmem>>, vector<1x8x1xf32>
      %56 = vector.shape_cast %55 : vector<1x8x1xf32> to vector<8x1xf32>
      %57 = vector.shape_cast %54 : vector<8x1xf32> to vector<1x8x1xf32>
      tpu.vector_store %arg8[%c0_33, %c0_34, %c0_35], %57 {strides = array<i32>} : memref<1x8x1xf32, #tpu.memory_space<vmem>>, vector<1x8x1xf32>,
      %c0_36 = arith.constant 0 : index
      %c0_37 = arith.constant 0 : index
      %58 = vector.load %arg12[%c0_36, %c0_37] : memref<8x1xf32, #tpu.memory_space<vmem>>, vector<8x1xf32>
      %c0_38 = arith.constant 0 : index
      %c0_39 = arith.constant 0 : index
      %c0_40 = arith.constant 0 : index
      %59 = vector.load %arg9[%c0_38, %c0_39, %c0_40] : memref<1x8x1xf32, #tpu.memory_space<vmem>>, vector<1x8x1xf32>
      %60 = vector.shape_cast %59 : vector<1x8x1xf32> to vector<8x1xf32>
      %61 = vector.shape_cast %58 : vector<8x1xf32> to vector<1x8x1xf32>
      tpu.vector_store %arg9[%c0_38, %c0_39, %c0_40], %61 {strides = array<i32>} : memref<1x8x1xf32, #tpu.memory_space<vmem>>, vector<1x8x1xf32>,
      %c0_41 = arith.constant 0 : index
      %c0_42 = arith.constant 0 : index
      %62 = vector.load %arg13[%c0_41, %c0_42] : memref<8x1xf32, #tpu.memory_space<vmem>>, vector<8x1xf32>
      %c0_43 = arith.constant 0 : index
      %c0_44 = arith.constant 0 : index
      %c0_45 = arith.constant 0 : index
      %63 = vector.load %arg10[%c0_43, %c0_44, %c0_45] : memref<1x8x1xf32, #tpu.memory_space<vmem>>, vector<1x8x1xf32>
      %64 = vector.shape_cast %63 : vector<1x8x1xf32> to vector<8x1xf32>
      %65 = vector.shape_cast %62 : vector<8x1xf32> to vector<1x8x1xf32>
      tpu.vector_store %arg10[%c0_43, %c0_44, %c0_45], %65 {strides = array<i32>} : memref<1x8x1xf32, #tpu.memory_space<vmem>>, vector<1x8x1xf32>,
    } else {
    }
    return
  }
  func.func @transform_0(%arg0: i32, %arg1: i32) -> (i32, i32) {
    %c0_i32 = arith.constant 0 : i32
    %c0_i32_0 = arith.constant 0 : i32
    %c0_i32_1 = arith.constant 0 : i32
    return %c0_i32, %c0_i32_0 : i32, i32
  }
  func.func @transform_1(%arg0: i32, %arg1: i32) -> (i32, i32) {
    %c0_i32 = arith.constant 0 : i32
    %c0_i32_0 = arith.constant 0 : i32
    %c0_i32_1 = arith.constant 0 : i32
    return %c0_i32, %c0_i32_0 : i32, i32
  }
  func.func @transform_2(%arg0: i32, %arg1: i32) -> (i32, i32) {
    %c0_i32 = arith.constant 0 : i32
    %c0_i32_0 = arith.constant 0 : i32
    %c0_i32_1 = arith.constant 0 : i32
    return %c0_i32, %c0_i32_0 : i32, i32
  }
  func.func @transform_3(%arg0: i32, %arg1: i32) -> (i32, i32) {
    %c2_i32 = arith.constant 2 : i32
    %0 = arith.muli %arg0, %c2_i32 : i32
    %1 = arith.addi %0, %arg1 : i32
    %c0_i32 = arith.constant 0 : i32
    %c0_i32_0 = arith.constant 0 : i32
    return %c0_i32, %1 : i32, i32
  }
  func.func @transform_4(%arg0: i32, %arg1: i32) -> (i32, i32) {
    %c2_i32 = arith.constant 2 : i32
    %0 = arith.muli %arg0, %c2_i32 : i32
    %1 = arith.addi %0, %arg1 : i32
    %c0_i32 = arith.constant 0 : i32
    %c0_i32_0 = arith.constant 0 : i32
    return %c0_i32, %1 : i32, i32
  }
  func.func @transform_5(%arg0: i32, %arg1: i32) -> (i32, i32) {
    %c2_i32 = arith.constant 2 : i32
    %0 = arith.muli %arg0, %c2_i32 : i32
    %1 = arith.addi %0, %arg1 : i32
    %c0_i32 = arith.constant 0 : i32
    %c0_i32_0 = arith.constant 0 : i32
    return %c0_i32, %1 : i32, i32
  }
  func.func @transform_6(%arg0: i32, %arg1: i32) -> (i32, i32, i32) {
    %c0_i32 = arith.constant 0 : i32
    %c0_i32_0 = arith.constant 0 : i32
    %c0_i32_1 = arith.constant 0 : i32
    return %arg0, %c0_i32, %c0_i32_0 : i32, i32, i32
  }
  func.func @transform_7(%arg0: i32, %arg1: i32) -> (i32, i32, i32) {
    %c0_i32 = arith.constant 0 : i32
    %c0_i32_0 = arith.constant 0 : i32
    %c0_i32_1 = arith.constant 0 : i32
    return %arg0, %c0_i32, %c0_i32_0 : i32, i32, i32
  }
  func.func @transform_8(%arg0: i32, %arg1: i32) -> (i32, i32, i32) {
    %c0_i32 = arith.constant 0 : i32
    %c0_i32_0 = arith.constant 0 : i32
    %c0_i32_1 = arith.constant 0 : i32
    return %arg0, %c0_i32, %c0_i32_0 : i32, i32, i32
  }
}

</mosaic_0001>

<llo_original>
// kernel: kd_loss_forward.1
$region0: #{kd_loss_forward.1}
  #allocation0 [shape = 'u32[]', space=smem, size = 0x4, offset = 0x4, fixed_abs, tag = 'smem constant byte address 0x4 - core index']
  #allocation1 [shape = 'u32[144,128]{1,0:T(1,128)}', space=vmem, size = 0x12000, scoped, tag = 'internal scratch']
  #allocation2 [shape = 'f32[8,1]{1,0:T(8,128)}', space=vmem, size = 0x1000, scoped, tag = 'scratch operand']
  #allocation3 [shape = 'f32[8,1]{1,0:T(8,128)}', space=vmem, size = 0x1000, scoped, tag = 'scratch operand']
  #allocation4 [shape = 'f32[8,1]{1,0:T(8,128)}', space=vmem, size = 0x1000, scoped, tag = 'scratch operand']
  %s0 = inlined_call_operand.vmem [shape: bf16[8,512], index: 0, kind: input, shape index: {}]
  %s1 = inlined_call_operand.vmem [shape: f32[8,1], index: 1, kind: input, shape index: {}]
  %s2 = inlined_call_operand.vmem [shape: s32[8,1], index: 2, kind: input, shape index: {}]
  %s3 = inlined_call_operand.hbm [shape: bf16[512,1024], index: 3, kind: input, shape index: {}]
  %s4 = inlined_call_operand.vmem [shape: f32[1,1024], index: 4, kind: input, shape index: {}]
  %s5 = inlined_call_operand.vmem [shape: f32[1,1024], index: 5, kind: input, shape index: {}]
  %s6 = inlined_call_operand.vmem [shape: f32[2,8,1], index: 6, kind: output, shape index: {0}]
  %s7 = inlined_call_operand.vmem [shape: f32[2,8,1], index: 7, kind: output, shape index: {1}]
  %s8 = inlined_call_operand.vmem [shape: f32[2,8,1], index: 8, kind: output, shape index: {2}]
  %9 = xla_tuple %s6, %s7, %s8
  %s10 = sld [smem:[#allocation0]]
  $region85: #{kd_loss_forward.1} parent=0
    _
  %s12 = ssub.s32 1, %s10
  %s13 = scalar_select 0, %s12, %s10
  $region1: #{kd_loss_forward.1} parent=0
    #allocation5 [shape = 'u8[524288]{0}', space=vmem, size = 0x80000, scoped, tag = 'input window, operand 3']
    #allocation6 [shape = 's32[2]{0}', space=sflag, size = 0x8, scoped, tag = 'scoped memory for kd_loss_forward.1']
    %14 = vsyncpa [#allocation6], 0
    %s15 = scalar_lea.sflag [#allocation6], 1
    %16 = vsyncpa %s15, 0
    loop: start=0, step=1, limit=6
    $region2: #{kd_loss_forward.1} parent=1 // loop_pre_header
      _
    $region3: #{kd_loss_forward.1} parent=1 // loop_header
      %s18 = sphi 0, %s22
      %p19 = scmp.ge.s32.totalorder %s18, 6
      %s25 = sphi 0, %s37
      %s26 = sphi 0, %s33
      %s27 = sphi 0, %s25
      %s28 = sphi 0, %s26
      %s29 = sphi 0, %s27
      %s30 = sphi 0, %s28
      %s38 = sphi 0, %s38
      %s40 = sphi 0, %s38
      %s41 = sphi 0, %s40
      %s55 = sphi 0, %s41
      %s59 = sphi 0, %s59
      %s61 = sphi 0, %s59
      %s62 = sphi 0, %s61
      %s76 = sphi 0, %s62
      %s80 = sphi 0, %s80
      %s82 = sphi 0, %s80
      %s83 = sphi 0, %s82
      %s97 = sphi 0, %s83
      %s107 = sphi 0, %s109
      %s110 = sphi 0, %s107
      %s111 = sphi 0, %s110
      %s127 = sphi 0, %s111
      %s137 = sphi 0, %s139
      %s140 = sphi 0, %s137
      %s141 = sphi 0, %s140
      %s157 = sphi 0, %s141
      %s167 = sphi 0, %s169
      %s170 = sphi 0, %s167
      %s171 = sphi 0, %s170
      %s187 = sphi 0, %s171
      %s193 = sphi 0, %s195
      %s196 = sphi 0, %s193
      %s197 = sphi 0, %s196
      %s213 = sphi 0, %s197
      %s219 = sphi 0, %s221
      %s222 = sphi 0, %s219
      %s223 = sphi 0, %s222
      %s239 = sphi 0, %s223
      %s245 = sphi 0, %s247
      %s248 = sphi 0, %s245
      %s249 = sphi 0, %s248
      %s265 = sphi 0, %s249
    $region4: #{kd_loss_forward.1} parent=1 // loop_header_branch
      %21 = sbr.rel (%p19) target = $region8
    $region5: #{kd_loss_forward.1} parent=1 // loop_body
      %s23 = ssub.s32 %s18, 1
      %s24 = ssub.s32 %s18, 2
      %s31 = sadd.s32 1, %s26
      %p32 = scmp.ge.s32.totalorder %s31, 2
      %s33 = scalar_select %p32, 0, %s31
      %s34 = sadd.s32 1, %s25
      %s35 = scalar_select %p32, %s34, %s25
      %p36 = scmp.ge.s32.totalorder %s35, 2
      %s37 = scalar_select %p36, 0, %s35
      %s39 = sadd.s32 %s38, 1
      %p42 = scmp.eq.s32.totalorder %s18, 3
      %p43 = scmp.ne.s32.totalorder %s38, %s40
      %p44 = scmp.eq.s32.totalorder %s18, 0
      %p45 = por %p43, %p44
      %p46 = scmp.ne.s32.totalorder %s38, %s40
      %p47 = scmp.eq.s32.totalorder %s23, 3
      %p48 = por %p46, %p47
      %p49 = scmp.ne.s32.totalorder %s40, %s41
      %p50 = scmp.eq.s32.totalorder %s23, 0
      %p51 = por %p49, %p50
      %p52 = scmp.ne.s32.totalorder %s40, %s41
      %p53 = scmp.eq.s32.totalorder %s24, 3
      %p54 = por %p52, %p53
      %p56 = scmp.ne.s32.totalorder %s41, %s55
      %p57 = scmp.eq.s32.totalorder %s24, 0
      %p58 = por %p56, %p57
      %s60 = sadd.s32 %s59, 1
      %p63 = scmp.eq.s32.totalorder %s18, 3
      %p64 = scmp.ne.s32.totalorder %s59, %s61
      %p65 = scmp.eq.s32.totalorder %s18, 0
      %p66 = por %p64, %p65
      %p67 = scmp.ne.s32.totalorder %s59, %s61
      %p68 = scmp.eq.s32.totalorder %s23, 3
      %p69 = por %p67, %p68
      %p70 = scmp.ne.s32.totalorder %s61, %s62
      %p71 = scmp.eq.s32.totalorder %s23, 0
      %p72 = por %p70, %p71
      %p73 = scmp.ne.s32.totalorder %s61, %s62
      %p74 = scmp.eq.s32.totalorder %s24, 3
      %p75 = por %p73, %p74
      %p77 = scmp.ne.s32.totalorder %s62, %s76
      %p78 = scmp.eq.s32.totalorder %s24, 0
      %p79 = por %p77, %p78
      %s81 = sadd.s32 %s80, 1
      %p84 = scmp.eq.s32.totalorder %s18, 3
      %p85 = scmp.ne.s32.totalorder %s80, %s82
      %p86 = scmp.eq.s32.totalorder %s18, 0
      %p87 = por %p85, %p86
      %p88 = scmp.ne.s32.totalorder %s80, %s82
      %p89 = scmp.eq.s32.totalorder %s23, 3
      %p90 = por %p88, %p89
      %p91 = scmp.ne.s32.totalorder %s82, %s83
      %p92 = scmp.eq.s32.totalorder %s23, 0
      %p93 = por %p91, %p92
      %p94 = scmp.ne.s32.totalorder %s82, %s83
      %p95 = scmp.eq.s32.totalorder %s24, 3
      %p96 = por %p94, %p95
      %p98 = scmp.ne.s32.totalorder %s83, %s97
      %p99 = scmp.eq.s32.totalorder %s24, 0
      %p100 = por %p98, %p99
      %s101 = smul.u32 %s25, 2
      %s102 = sadd.s32 %s101, %s26
      %s103 = smul.u32 %s37, 2
      %s104 = sadd.s32 %s103, %s33
      %s105 = ssub.s32 %s102, %s104
      %p106 = scmp.eq.s32.totalorder %s105, 0
      %s108 = sadd.s32 %s107, 1
      %s109 = scalar_select %p106, %s107, %s108
      %p112 = pneg %p106
      %p113 = scmp.eq.s32.totalorder %s18, 3
      %p114 = por %p112, %p113
      %p115 = scmp.ne.s32.totalorder %s107, %s110
      %p116 = scmp.eq.s32.totalorder %s18, 0
      %p117 = por %p115, %p116
      %p118 = scmp.ne.s32.totalorder %s107, %s110
      %p119 = scmp.eq.s32.totalorder %s23, 3
      %p120 = por %p118, %p119
      %p121 = scmp.ne.s32.totalorder %s110, %s111
      %p122 = scmp.eq.s32.totalorder %s23, 0
      %p123 = por %p121, %p122
      %p124 = scmp.ne.s32.totalorder %s110, %s111
      %p125 = scmp.eq.s32.totalorder %s24, 3
      %p126 = por %p124, %p125
      %p128 = scmp.ne.s32.totalorder %s111, %s127
      %p129 = scmp.eq.s32.totalorder %s24, 0
      %p130 = por %p128, %p129
      %s131 = smul.u32 %s25, 2
      %s132 = sadd.s32 %s131, %s26
      %s133 = smul.u32 %s37, 2
      %s134 = sadd.s32 %s133, %s33
      %s135 = ssub.s32 %s132, %s134
      %p136 = scmp.eq.s32.totalorder %s135, 0
      %s138 = sadd.s32 %s137, 1
      %s139 = scalar_select %p136, %s137, %s138
      %p142 = pneg %p136
      %p143 = scmp.eq.s32.totalorder %s18, 3
      %p144 = por %p142, %p143
      %p145 = scmp.ne.s32.totalorder %s137, %s140
      %p146 = scmp.eq.s32.totalorder %s18, 0
      %p147 = por %p145, %p146
      %p148 = scmp.ne.s32.totalorder %s137, %s140
      %p149 = scmp.eq.s32.totalorder %s23, 3
      %p150 = por %p148, %p149
      %p151 = scmp.ne.s32.totalorder %s140, %s141
      %p152 = scmp.eq.s32.totalorder %s23, 0
      %p153 = por %p151, %p152
      %p154 = scmp.ne.s32.totalorder %s140, %s141
      %p155 = scmp.eq.s32.totalorder %s24, 3
      %p156 = por %p154, %p155
      %p158 = scmp.ne.s32.totalorder %s141, %s157
      %p159 = scmp.eq.s32.totalorder %s24, 0
      %p160 = por %p158, %p159
      %s161 = smul.u32 %s25, 2
      %s162 = sadd.s32 %s161, %s26
      %s163 = smul.u32 %s37, 2
      %s164 = sadd.s32 %s163, %s33
      %s165 = ssub.s32 %s162, %s164
      %p166 = scmp.eq.s32.totalorder %s165, 0
      %s168 = sadd.s32 %s167, 1
      %s169 = scalar_select %p166, %s167, %s168
      %p172 = pneg %p166
      %p173 = scmp.eq.s32.totalorder %s18, 3
      %p174 = por %p172, %p173
      %p175 = scmp.ne.s32.totalorder %s167, %s170
      %p176 = scmp.eq.s32.totalorder %s18, 0
      %p177 = por %p175, %p176
      %p178 = scmp.ne.s32.totalorder %s167, %s170
      %p179 = scmp.eq.s32.totalorder %s23, 3
      %p180 = por %p178, %p179
      %p181 = scmp.ne.s32.totalorder %s170, %s171
      %p182 = scmp.eq.s32.totalorder %s23, 0
      %p183 = por %p181, %p182
      %p184 = scmp.ne.s32.totalorder %s170, %s171
      %p185 = scmp.eq.s32.totalorder %s24, 3
      %p186 = por %p184, %p185
      %p188 = scmp.ne.s32.totalorder %s171, %s187
      %p189 = scmp.eq.s32.totalorder %s24, 0
      %p190 = por %p188, %p189
      %s191 = ssub.s32 %s25, %s37
      %p192 = scmp.eq.s32.totalorder %s191, 0
      %s194 = sadd.s32 %s193, 1
      %s195 = scalar_select %p192, %s193, %s194
      %p198 = pneg %p192
      %p199 = scmp.eq.s32.totalorder %s18, 3
      %p200 = por %p198, %p199
      %p201 = scmp.ne.s32.totalorder %s193, %s196
      %p202 = scmp.eq.s32.totalorder %s18, 0
      %p203 = por %p201, %p202
      %p204 = scmp.ne.s32.totalorder %s193, %s196
      %p205 = scmp.eq.s32.totalorder %s23, 3
      %p206 = por %p204, %p205
      %p207 = scmp.ne.s32.totalorder %s196, %s197
      %p208 = scmp.eq.s32.totalorder %s23, 0
      %p209 = por %p207, %p208
      %p210 = scmp.ne.s32.totalorder %s196, %s197
      %p211 = scmp.eq.s32.totalorder %s24, 3
      %p212 = por %p210, %p211
      %p214 = scmp.ne.s32.totalorder %s197, %s213
      %p215 = scmp.eq.s32.totalorder %s24, 0
      %p216 = por %p214, %p215
      %s217 = ssub.s32 %s25, %s37
      %p218 = scmp.eq.s32.totalorder %s217, 0
      %s220 = sadd.s32 %s219, 1
      %s221 = scalar_select %p218, %s219, %s220
      %p224 = pneg %p218
      %p225 = scmp.eq.s32.totalorder %s18, 3
      %p226 = por %p224, %p225
      %p227 = scmp.ne.s32.totalorder %s219, %s222
      %p228 = scmp.eq.s32.totalorder %s18, 0
      %p229 = por %p227, %p228
      %p230 = scmp.ne.s32.totalorder %s219, %s222
      %p231 = scmp.eq.s32.totalorder %s23, 3
      %p232 = por %p230, %p231
      %p233 = scmp.ne.s32.totalorder %s222, %s223
      %p234 = scmp.eq.s32.totalorder %s23, 0
      %p235 = por %p233, %p234
      %p236 = scmp.ne.s32.totalorder %s222, %s223
      %p237 = scmp.eq.s32.totalorder %s24, 3
      %p238 = por %p236, %p237
      %p240 = scmp.ne.s32.totalorder %s223, %s239
      %p241 = scmp.eq.s32.totalorder %s24, 0
      %p242 = por %p240, %p241
      %s243 = ssub.s32 %s25, %s37
      %p244 = scmp.eq.s32.totalorder %s243, 0
      %s246 = sadd.s32 %s245, 1
      %s247 = scalar_select %p244, %s245, %s246
      %p250 = pneg %p244
      %p251 = scmp.eq.s32.totalorder %s18, 3
      %p252 = por %p250, %p251
      %p253 = scmp.ne.s32.totalorder %s245, %s248
      %p254 = scmp.eq.s32.totalorder %s18, 0
      %p255 = por %p253, %p254
      %p256 = scmp.ne.s32.totalorder %s245, %s248
      %p257 = scmp.eq.s32.totalorder %s23, 3
      %p258 = por %p256, %p257
      %p259 = scmp.ne.s32.totalorder %s248, %s249
      %p260 = scmp.eq.s32.totalorder %s23, 0
      %p261 = por %p259, %p260
      %p262 = scmp.ne.s32.totalorder %s248, %s249
      %p263 = scmp.eq.s32.totalorder %s24, 3
      %p264 = por %p262, %p263
      %p266 = scmp.ne.s32.totalorder %s249, %s265
      %p267 = scmp.eq.s32.totalorder %s24, 0
      %p268 = por %p266, %p267
      %p269 = scmp.le.s32.totalorder 1, %s18
      %p270 = scmp.lt.s32.totalorder %s18, 5
      %p271 = pnand %p269, %p270
      %p272 = pneg %p271
      // Predicated region
      $region9: #{kd_loss_forward.1} parent=5 // pred_check
        _
      $region10: #{kd_loss_forward.1} parent=5 // pred_check_branch
        %274 = sbr.rel (%p271) target = $region12
      $region11: #{kd_loss_forward.1} parent=5 // pred_region
        %s275 = ssub.s32 %s18, 1
        // Predicated region
        $region13: #{kd_loss_forward.1} parent=11 // pred_check
          %p276 = pneg %p51
        $region14: #{kd_loss_forward.1} parent=11 // pred_check_branch
          %278 = sbr.rel (%p276) target = $region16
        $region15: #{kd_loss_forward.1} parent=11 // pred_region
          _
        $region16: #{kd_loss_forward.1} parent=11 // pred_fallthru
          _
        // Predicated region
        $region17: #{kd_loss_forward.1} parent=11 // pred_check
          %p279 = pneg %p72
        $region18: #{kd_loss_forward.1} parent=11 // pred_check_branch
          %281 = sbr.rel (%p279) target = $region20
        $region19: #{kd_loss_forward.1} parent=11 // pred_region
          _
        $region20: #{kd_loss_forward.1} parent=11 // pred_fallthru
          _
        // Predicated region
        $region21: #{kd_loss_forward.1} parent=11 // pred_check
          %p282 = pneg %p93
        $region22: #{kd_loss_forward.1} parent=11 // pred_check_branch
          %284 = sbr.rel (%p282) target = $region24
        $region23: #{kd_loss_forward.1} parent=11 // pred_region
          _
        $region24: #{kd_loss_forward.1} parent=11 // pred_fallthru
          _
      $region12: #{kd_loss_forward.1} parent=5 // pred_fallthru
        _
      %p285 = scmp.lt.s32.totalorder %s18, 4
      // Predicated region
      $region25: #{kd_loss_forward.1} parent=5 // pred_check
        %p286 = pneg %p285
      $region26: #{kd_loss_forward.1} parent=5 // pred_check_branch
        %288 = sbr.rel (%p286) target = $region28
      $region27: #{kd_loss_forward.1} parent=5 // pred_region
        // Predicated region
        $region29: #{kd_loss_forward.1} parent=27 // pred_check
          %p289 = pneg %p117
        $region30: #{kd_loss_forward.1} parent=27 // pred_check_branch
          %291 = sbr.rel (%p289) target = $region32
        $region31: #{kd_loss_forward.1} parent=27 // pred_region
          %s292 = sand.u32 %s107, 1
          %s293 = scalar_lea.sflag [#allocation6], %s292
          %s294 = sand.u32 %s107, 1
          %s295 = smul.addr %s294, 512
          %s296 = scalar_lea.vmem [#allocation5], %s295
          %s297 = smul.u32 %s25, 2
          %s298 = sadd.s32 %s297, %s26
          %s299 = smul.u32 2, %s298
          %s301 = ssub.s32 8192, 8192
          %302 = vsyncadd %s293, %s301
          %s303 = smul.addr %s299, 64
          %s304 = scalar_lea.hbm %s3, %s303
          %s305 = sshll.u32 %s296, 4
          %s306 = int_to_ptr.vmem [resolvable:$true] %s305
          %311 = dma.hbm_to_vmem [thread:$0]  %s304, 8192, %s306, %s293, 512, 128, 8
        $region32: #{kd_loss_forward.1} parent=27 // pred_fallthru
          _
        // Predicated region
        $region33: #{kd_loss_forward.1} parent=27 // pred_check
          %p312 = pneg %p147
        $region34: #{kd_loss_forward.1} parent=27 // pred_check_branch
          %314 = sbr.rel (%p312) target = $region36
        $region35: #{kd_loss_forward.1} parent=27 // pred_region
          %s315 = smul.u32 %s25, 2
          %s316 = sadd.s32 %s315, %s26
          %s317 = smul.u32 2, %s316
          %p318 = scmp.lt.s32.totalorder %s317, 7
          %s319 = scalar_select %p318, %s317, 7
          %s320 = scalar_lea.vmem %s4, %s319
          %s321 = smul.u32 %s25, 2
          %s322 = sadd.s32 %s321, %s26
          %s323 = smul.u32 2, %s322
        $region36: #{kd_loss_forward.1} parent=27 // pred_fallthru
          _
        // Predicated region
        $region37: #{kd_loss_forward.1} parent=27 // pred_check
          %p324 = pneg %p177
        $region38: #{kd_loss_forward.1} parent=27 // pred_check_branch
          %326 = sbr.rel (%p324) target = $region40
        $region39: #{kd_loss_forward.1} parent=27 // pred_region
          %s327 = smul.u32 %s25, 2
          %s328 = sadd.s32 %s327, %s26
          %s329 = smul.u32 2, %s328
          %p330 = scmp.lt.s32.totalorder %s329, 7
          %s331 = scalar_select %p330, %s329, 7
          %s332 = scalar_lea.vmem %s5, %s331
          %s333 = smul.u32 %s25, 2
          %s334 = sadd.s32 %s333, %s26
          %s335 = smul.u32 2, %s334
        $region40: #{kd_loss_forward.1} parent=27 // pred_fallthru
          _
      $region28: #{kd_loss_forward.1} parent=5 // pred_fallthru
        _
      %p336 = scmp.le.s32.totalorder 1, %s18
      %p337 = scmp.lt.s32.totalorder %s18, 5
      %p338 = pnand %p336, %p337
      %p339 = pneg %p338
      // Predicated region
      $region41: #{kd_loss_forward.1} parent=5 // pred_check
        _
      $region42: #{kd_loss_forward.1} parent=5 // pred_check_branch
        %341 = sbr.rel (%p338) target = $region44
      $region43: #{kd_loss_forward.1} parent=5 // pred_region
        %s342 = ssub.s32 %s18, 1
        %s343 = sand.u32 %s110, 1
        %s344 = scalar_lea.sflag [#allocation6], %s343
        %s345 = sand.u32 %s110, 1
        %s346 = smul.addr %s345, 512
        %s347 = scalar_lea.vmem [#allocation5], %s346
        // Predicated region
        $region45: #{kd_loss_forward.1} parent=43 // pred_check
          %p348 = pneg %p123
        $region46: #{kd_loss_forward.1} parent=43 // pred_check_branch
          %350 = sbr.rel (%p348) target = $region48
        $region47: #{kd_loss_forward.1} parent=43 // pred_region
          %351 = dma.done %s344, 8192
        $region48: #{kd_loss_forward.1} parent=43 // pred_fallthru
          _
        %p352 = pneg %p51
        %p353 = pneg %p48
        %p354 = pneg %p72
        %p355 = pneg %p69
        %p356 = pneg %p93
        %p357 = pneg %p90
        %s358 = sand.u32 %s110, 1
        %s359 = scalar_lea.sflag [#allocation6], %s358
        %s360 = sand.u32 %s110, 1
        %s361 = smul.addr %s360, 512
        %s362 = scalar_lea.vmem [#allocation5], %s361
        %p363 = pneg %p123
        %p364 = pneg %p120
        %s365 = smul.u32 %s27, 2
        %s366 = sadd.s32 %s365, %s28
        %s367 = smul.u32 2, %s366
        %p368 = scmp.lt.s32.totalorder %s367, 7
        %s369 = scalar_select %p368, %s367, 7
        %s370 = scalar_lea.vmem %s4, %s369
        %p371 = pneg %p153
        %p372 = pneg %p150
        %s373 = smul.u32 %s27, 2
        %s374 = sadd.s32 %s373, %s28
        %s375 = smul.u32 2, %s374
        %p376 = scmp.lt.s32.totalorder %s375, 7
        %s377 = scalar_select %p376, %s375, 7
        %s378 = scalar_lea.vmem %s5, %s377
        %p379 = pneg %p183
        %p380 = pneg %p180
        %p381 = pneg %p209
        %p382 = pneg %p206
        %p383 = scmp.lt.s32.totalorder %s27, 1
        %s384 = scalar_select %p383, %s27, 1
        %s385 = smul.addr %s384, 8
        %s386 = scalar_lea.vmem %s6, %s385
        %p387 = pneg %p235
        %p388 = pneg %p232
        %p389 = scmp.lt.s32.totalorder %s27, 1
        %s390 = scalar_select %p389, %s27, 1
        %s391 = smul.addr %s390, 8
        %s392 = scalar_lea.vmem %s7, %s391
        %p393 = pneg %p261
        %p394 = pneg %p258
        %p395 = scmp.lt.s32.totalorder %s27, 1
        %s396 = scalar_select %p395, %s27, 1
        %s397 = smul.addr %s396, 8
        %s398 = scalar_lea.vmem %s8, %s397
        %s399 = smul.u32 %s27, 2
        %s400 = sadd.s32 %s399, %s28
        %s401 = smul.u32 2, %s400
        %s402 = smul.u32 %s27, 2
        %s403 = sadd.s32 %s402, %s28
        %s404 = smul.u32 2, %s403
        %p405 = scmp.lt.s32.totalorder %s404, 7
        %s406 = scalar_select %p405, %s404, 7
        %s407 = scalar_lea.vmem %s4, %s406
        %s408 = smul.u32 %s27, 2
        %s409 = sadd.s32 %s408, %s28
        %s410 = smul.u32 2, %s409
        %s411 = smul.u32 %s27, 2
        %s412 = sadd.s32 %s411, %s28
        %s413 = smul.u32 2, %s412
        %p414 = scmp.lt.s32.totalorder %s413, 7
        %s415 = scalar_select %p414, %s413, 7
        %s416 = scalar_lea.vmem %s5, %s415
        %s417 = smul.u32 %s27, 2
        %s418 = sadd.s32 %s417, %s28
        %s419 = smul.u32 2, %s418
        %p420 = scmp.lt.s32.totalorder %s27, 1
        %s421 = scalar_select %p420, %s27, 1
        %s422 = smul.addr %s421, 8
        %s423 = scalar_lea.vmem %s6, %s422
        %p424 = scmp.lt.s32.totalorder %s27, 1
        %s425 = scalar_select %p424, %s27, 1
        %s426 = smul.addr %s425, 8
        %s427 = scalar_lea.vmem %s7, %s426
        %p428 = scmp.lt.s32.totalorder %s27, 1
        %s429 = scalar_select %p428, %s27, 1
        %s430 = smul.addr %s429, 8
        %s431 = scalar_lea.vmem %s8, %s430
        %p432 = scmp.eq.s32.totalorder %s28, 0
        // Predicated region
        $region49: #{kd_loss_forward.1} parent=43 // pred_check
          %p433 = pneg %p432
        $region50: #{kd_loss_forward.1} parent=43 // pred_check_branch
          %435 = sbr.rel (%p433) target = $region52
        $region51: #{kd_loss_forward.1} parent=43 // pred_region
          %vm436 = vcmask 7168
          %437 = vst.msk [vmem:[#allocation2] sm:$0xff] %vm436, -inf
          %438 = vst.msk [vmem:[#allocation3] sm:$0xff] %vm436, 0.0
          %439 = vst.msk [vmem:[#allocation4] sm:$0xff] %vm436, 0.0
        $region52: #{kd_loss_forward.1} parent=43 // pred_fallthru
          _
        %v440 = vld [vmem:[%s0] sm:$0xff]
        %v441 = vld [vmem:[%s0 + $0x8] sm:$0xff]
        %v442 = vld [vmem:[%s347] sm:$0xff]
        %v443 = vld [vmem:[%s347 + $0x8] sm:$0xff]
        %v444 = vld [vmem:[%s347 + $0x10] sm:$0xff]
        %v445 = vld [vmem:[%s347 + $0x18] sm:$0xff]
        %v446 = vld [vmem:[%s347 + $0x20] sm:$0xff]
        %v447 = vld [vmem:[%s347 + $0x28] sm:$0xff]
        %v448 = vld [vmem:[%s347 + $0x30] sm:$0xff]
        %v449 = vld [vmem:[%s347 + $0x38] sm:$0xff]
        %v450 = vld [vmem:[%s347 + $0x40] sm:$0xff]
        %v451 = vld [vmem:[%s347 + $0x48] sm:$0xff]
        %v452 = vld [vmem:[%s347 + $0x50] sm:$0xff]
        %v453 = vld [vmem:[%s347 + $0x58] sm:$0xff]
        %v454 = vld [vmem:[%s347 + $0x60] sm:$0xff]
        %v455 = vld [vmem:[%s347 + $0x68] sm:$0xff]
        %v456 = vld [vmem:[%s347 + $0x70] sm:$0xff]
        %v457 = vld [vmem:[%s347 + $0x78] sm:$0xff]
        %v458 = vld [vmem:[%s347 + $0x80] sm:$0xff]
        %v459 = vld [vmem:[%s347 + $0x88] sm:$0xff]
        %v460 = vld [vmem:[%s347 + $0x90] sm:$0xff]
        %v461 = vld [vmem:[%s347 + $0x98] sm:$0xff]
        %v462 = vld [vmem:[%s347 + $0xa0] sm:$0xff]
        %v463 = vld [vmem:[%s347 + $0xa8] sm:$0xff]
        %v464 = vld [vmem:[%s347 + $0xb0] sm:$0xff]
        %v465 = vld [vmem:[%s347 + $0xb8] sm:$0xff]
        %v466 = vld [vmem:[%s347 + $0xc0] sm:$0xff]
        %v467 = vld [vmem:[%s347 + $0xc8] sm:$0xff]
        %v468 = vld [vmem:[%s347 + $0xd0] sm:$0xff]
        %v469 = vld [vmem:[%s347 + $0xd8] sm:$0xff]
        %v470 = vld [vmem:[%s347 + $0xe0] sm:$0xff]
        %v471 = vld [vmem:[%s347 + $0xe8] sm:$0xff]
        %v472 = vld [vmem:[%s347 + $0xf0] sm:$0xff]
        %v473 = vld [vmem:[%s347 + $0xf8] sm:$0xff]
        %v474 = vld [vmem:[%s347 + $0x100] sm:$0xff]
        %v475 = vld [vmem:[%s347 + $0x108] sm:$0xff]
        %v476 = vld [vmem:[%s347 + $0x110] sm:$0xff]
        %v477 = vld [vmem:[%s347 + $0x118] sm:$0xff]
        %v478 = vld [vmem:[%s347 + $0x120] sm:$0xff]
        %v479 = vld [vmem:[%s347 + $0x128] sm:$0xff]
        %v480 = vld [vmem:[%s347 + $0x130] sm:$0xff]
        %v481 = vld [vmem:[%s347 + $0x138] sm:$0xff]
        %v482 = vld [vmem:[%s347 + $0x140] sm:$0xff]
        %v483 = vld [vmem:[%s347 + $0x148] sm:$0xff]
        %v484 = vld [vmem:[%s347 + $0x150] sm:$0xff]
        %v485 = vld [vmem:[%s347 + $0x158] sm:$0xff]
        %v486 = vld [vmem:[%s347 + $0x160] sm:$0xff]
        %v487 = vld [vmem:[%s347 + $0x168] sm:$0xff]
        %v488 = vld [vmem:[%s347 + $0x170] sm:$0xff]
        %v489 = vld [vmem:[%s347 + $0x178] sm:$0xff]
        %v490 = vld [vmem:[%s347 + $0x180] sm:$0xff]
        %v491 = vld [vmem:[%s347 + $0x188] sm:$0xff]
        %v492 = vld [vmem:[%s347 + $0x190] sm:$0xff]
        %v493 = vld [vmem:[%s347 + $0x198] sm:$0xff]
        %v494 = vld [vmem:[%s347 + $0x1a0] sm:$0xff]
        %v495 = vld [vmem:[%s347 + $0x1a8] sm:$0xff]
        %v496 = vld [vmem:[%s347 + $0x1b0] sm:$0xff]
        %v497 = vld [vmem:[%s347 + $0x1b8] sm:$0xff]
        %v498 = vld [vmem:[%s347 + $0x1c0] sm:$0xff]
        %v499 = vld [vmem:[%s347 + $0x1c8] sm:$0xff]
        %v500 = vld [vmem:[%s347 + $0x1d0] sm:$0xff]
        %v501 = vld [vmem:[%s347 + $0x1d8] sm:$0xff]
        %v502 = vld [vmem:[%s347 + $0x1e0] sm:$0xff]
        %v503 = vld [vmem:[%s347 + $0x1e8] sm:$0xff]
        %v504 = vld [vmem:[%s347 + $0x1f0] sm:$0xff]
        %v505 = vld [vmem:[%s347 + $0x1f8] sm:$0xff]
        %v508 = vunpack.c.l.b16 %v440
        %v509 = vunpack.c.h.b16 %v440
        %v510 = vunpack.c.l.b16 %v441
        %v511 = vunpack.c.h.b16 %v441
        %v512 = vpack.c.b16 %v508, %v508
        %v513 = vpack.c.b16 %v509, %v509
        %v514 = vpack.c.b16 %v510, %v510
        %v515 = vpack.c.b16 %v511, %v511
        %v584 = vunpack.c.l.b16 %v442
        %v585 = vunpack.c.h.b16 %v442
        %v586 = vunpack.c.l.b16 %v443
        %v587 = vunpack.c.h.b16 %v443
        %v588 = vunpack.c.l.b16 %v444
        %v589 = vunpack.c.h.b16 %v444
        %v590 = vunpack.c.l.b16 %v445
        %v591 = vunpack.c.h.b16 %v445
        %v592 = vunpack.c.l.b16 %v446
        %v593 = vunpack.c.h.b16 %v446
        %v594 = vunpack.c.l.b16 %v447
        %v595 = vunpack.c.h.b16 %v447
        %v596 = vunpack.c.l.b16 %v448
        %v597 = vunpack.c.h.b16 %v448
        %v598 = vunpack.c.l.b16 %v449
        %v599 = vunpack.c.h.b16 %v449
        %v600 = vunpack.c.l.b16 %v450
        %v601 = vunpack.c.h.b16 %v450
        %v602 = vunpack.c.l.b16 %v451
        %v603 = vunpack.c.h.b16 %v451
        %v604 = vunpack.c.l.b16 %v452
        %v605 = vunpack.c.h.b16 %v452
        %v606 = vunpack.c.l.b16 %v453
        %v607 = vunpack.c.h.b16 %v453
        %v608 = vunpack.c.l.b16 %v454
        %v609 = vunpack.c.h.b16 %v454
        %v610 = vunpack.c.l.b16 %v455
        %v611 = vunpack.c.h.b16 %v455
        %v612 = vunpack.c.l.b16 %v456
        %v613 = vunpack.c.h.b16 %v456
        %v614 = vunpack.c.l.b16 %v457
        %v615 = vunpack.c.h.b16 %v457
        %v616 = vunpack.c.l.b16 %v458
        %v617 = vunpack.c.h.b16 %v458
        %v618 = vunpack.c.l.b16 %v459
        %v619 = vunpack.c.h.b16 %v459
        %v620 = vunpack.c.l.b16 %v460
        %v621 = vunpack.c.h.b16 %v460
        %v622 = vunpack.c.l.b16 %v461
        %v623 = vunpack.c.h.b16 %v461
        %v624 = vunpack.c.l.b16 %v462
        %v625 = vunpack.c.h.b16 %v462
        %v626 = vunpack.c.l.b16 %v463
        %v627 = vunpack.c.h.b16 %v463
        %v628 = vunpack.c.l.b16 %v464
        %v629 = vunpack.c.h.b16 %v464
        %v630 = vunpack.c.l.b16 %v465
        %v631 = vunpack.c.h.b16 %v465
        %v632 = vunpack.c.l.b16 %v466
        %v633 = vunpack.c.h.b16 %v466
        %v634 = vunpack.c.l.b16 %v467
        %v635 = vunpack.c.h.b16 %v467
        %v636 = vunpack.c.l.b16 %v468
        %v637 = vunpack.c.h.b16 %v468
        %v638 = vunpack.c.l.b16 %v469
        %v639 = vunpack.c.h.b16 %v469
        %v640 = vunpack.c.l.b16 %v470
        %v641 = vunpack.c.h.b16 %v470
        %v642 = vunpack.c.l.b16 %v471
        %v643 = vunpack.c.h.b16 %v471
        %v644 = vunpack.c.l.b16 %v472
        %v645 = vunpack.c.h.b16 %v472
        %v646 = vunpack.c.l.b16 %v473
        %v647 = vunpack.c.h.b16 %v473
        %v648 = vunpack.c.l.b16 %v474
        %v649 = vunpack.c.h.b16 %v474
        %v650 = vunpack.c.l.b16 %v475
        %v651 = vunpack.c.h.b16 %v475
        %v652 = vunpack.c.l.b16 %v476
        %v653 = vunpack.c.h.b16 %v476
        %v654 = vunpack.c.l.b16 %v477
        %v655 = vunpack.c.h.b16 %v477
        %v656 = vunpack.c.l.b16 %v478
        %v657 = vunpack.c.h.b16 %v478
        %v658 = vunpack.c.l.b16 %v479
        %v659 = vunpack.c.h.b16 %v479
        %v660 = vunpack.c.l.b16 %v480
        %v661 = vunpack.c.h.b16 %v480
        %v662 = vunpack.c.l.b16 %v481
        %v663 = vunpack.c.h.b16 %v481
        %v664 = vunpack.c.l.b16 %v482
        %v665 = vunpack.c.h.b16 %v482
        %v666 = vunpack.c.l.b16 %v483
        %v667 = vunpack.c.h.b16 %v483
        %v668 = vunpack.c.l.b16 %v484
        %v669 = vunpack.c.h.b16 %v484
        %v670 = vunpack.c.l.b16 %v485
        %v671 = vunpack.c.h.b16 %v485
        %v672 = vunpack.c.l.b16 %v486
        %v673 = vunpack.c.h.b16 %v486
        %v674 = vunpack.c.l.b16 %v487
        %v675 = vunpack.c.h.b16 %v487
        %v676 = vunpack.c.l.b16 %v488
        %v677 = vunpack.c.h.b16 %v488
        %v678 = vunpack.c.l.b16 %v489
        %v679 = vunpack.c.h.b16 %v489
        %v680 = vunpack.c.l.b16 %v490
        %v681 = vunpack.c.h.b16 %v490
        %v682 = vunpack.c.l.b16 %v491
        %v683 = vunpack.c.h.b16 %v491
        %v684 = vunpack.c.l.b16 %v492
        %v685 = vunpack.c.h.b16 %v492
        %v686 = vunpack.c.l.b16 %v493
        %v687 = vunpack.c.h.b16 %v493
        %v688 = vunpack.c.l.b16 %v494
        %v689 = vunpack.c.h.b16 %v494
        %v690 = vunpack.c.l.b16 %v495
        %v691 = vunpack.c.h.b16 %v495
        %v692 = vunpack.c.l.b16 %v496
        %v693 = vunpack.c.h.b16 %v496
        %v694 = vunpack.c.l.b16 %v497
        %v695 = vunpack.c.h.b16 %v497
        %v696 = vunpack.c.l.b16 %v498
        %v697 = vunpack.c.h.b16 %v498
        %v698 = vunpack.c.l.b16 %v499
        %v699 = vunpack.c.h.b16 %v499
        %v700 = vunpack.c.l.b16 %v500
        %v701 = vunpack.c.h.b16 %v500
        %v702 = vunpack.c.l.b16 %v501
        %v703 = vunpack.c.h.b16 %v501
        %v704 = vunpack.c.l.b16 %v502
        %v705 = vunpack.c.h.b16 %v502
        %v706 = vunpack.c.l.b16 %v503
        %v707 = vunpack.c.h.b16 %v503
        %v708 = vunpack.c.l.b16 %v504
        %v709 = vunpack.c.h.b16 %v504
        %v710 = vunpack.c.l.b16 %v505
        %v711 = vunpack.c.h.b16 %v505
        %v712 = vpack.c.b16 %v586, %v584
        %v713 = vpack.c.b16 %v587, %v585
        %v714 = vpack.c.b16 %v590, %v588
        %v715 = vpack.c.b16 %v591, %v589
        %v716 = vpack.c.b16 %v594, %v592
        %v717 = vpack.c.b16 %v595, %v593
        %v718 = vpack.c.b16 %v598, %v596
        %v719 = vpack.c.b16 %v599, %v597
        %v720 = vpack.c.b16 %v602, %v600
        %v721 = vpack.c.b16 %v603, %v601
        %v722 = vpack.c.b16 %v606, %v604
        %v723 = vpack.c.b16 %v607, %v605
        %v724 = vpack.c.b16 %v610, %v608
        %v725 = vpack.c.b16 %v611, %v609
        %v726 = vpack.c.b16 %v614, %v612
        %v727 = vpack.c.b16 %v615, %v613
        %v728 = vpack.c.b16 %v618, %v616
        %v729 = vpack.c.b16 %v619, %v617
        %v730 = vpack.c.b16 %v622, %v620
        %v731 = vpack.c.b16 %v623, %v621
        %v732 = vpack.c.b16 %v626, %v624
        %v733 = vpack.c.b16 %v627, %v625
        %v734 = vpack.c.b16 %v630, %v628
        %v735 = vpack.c.b16 %v631, %v629
        %v736 = vpack.c.b16 %v634, %v632
        %v737 = vpack.c.b16 %v635, %v633
        %v738 = vpack.c.b16 %v638, %v636
        %v739 = vpack.c.b16 %v639, %v637
        %v740 = vpack.c.b16 %v642, %v640
        %v741 = vpack.c.b16 %v643, %v641
        %v742 = vpack.c.b16 %v646, %v644
        %v743 = vpack.c.b16 %v647, %v645
        %v744 = vpack.c.b16 %v650, %v648
        %v745 = vpack.c.b16 %v651, %v649
        %v746 = vpack.c.b16 %v654, %v652
        %v747 = vpack.c.b16 %v655, %v653
        %v748 = vpack.c.b16 %v658, %v656
        %v749 = vpack.c.b16 %v659, %v657
        %v750 = vpack.c.b16 %v662, %v660
        %v751 = vpack.c.b16 %v663, %v661
        %v752 = vpack.c.b16 %v666, %v664
        %v753 = vpack.c.b16 %v667, %v665
        %v754 = vpack.c.b16 %v670, %v668
        %v755 = vpack.c.b16 %v671, %v669
        %v756 = vpack.c.b16 %v674, %v672
        %v757 = vpack.c.b16 %v675, %v673
        %v758 = vpack.c.b16 %v678, %v676
        %v759 = vpack.c.b16 %v679, %v677
        %v760 = vpack.c.b16 %v682, %v680
        %v761 = vpack.c.b16 %v683, %v681
        %v762 = vpack.c.b16 %v686, %v684
        %v763 = vpack.c.b16 %v687, %v685
        %v764 = vpack.c.b16 %v690, %v688
        %v765 = vpack.c.b16 %v691, %v689
        %v766 = vpack.c.b16 %v694, %v692
        %v767 = vpack.c.b16 %v695, %v693
        %v768 = vpack.c.b16 %v698, %v696
        %v769 = vpack.c.b16 %v699, %v697
        %v770 = vpack.c.b16 %v702, %v700
        %v771 = vpack.c.b16 %v703, %v701
        %v772 = vpack.c.b16 %v706, %v704
        %v773 = vpack.c.b16 %v707, %v705
        %v774 = vpack.c.b16 %v710, %v708
        %v775 = vpack.c.b16 %v711, %v709
        %840 = vmatprep.subr.bf16.mxu0 %v713
        %841 = vmatpush1.bf16.msra.mxu0 %v712
        %842 = vmatprep.subr.bf16.mxu0 %v715
        %843 = vmatpush1.bf16.msra.mxu0 %v714
        %844 = vmatprep.subr.bf16.mxu0 %v717
        %845 = vmatpush1.bf16.msra.mxu0 %v716
        %846 = vmatprep.subr.bf16.mxu0 %v719
        %847 = vmatpush1.bf16.msra.mxu0 %v718
        %848 = vmatprep.subr.bf16.mxu0 %v721
        %849 = vmatpush1.bf16.msra.mxu0 %v720
        %850 = vmatprep.subr.bf16.mxu0 %v723
        %851 = vmatpush1.bf16.msra.mxu0 %v722
        %852 = vmatprep.subr.bf16.mxu0 %v725
        %853 = vmatpush1.bf16.msra.mxu0 %v724
        %854 = vmatprep.subr.bf16.mxu0 %v727
        %855 = vmatpush1.bf16.msra.mxu0 %v726
        %856 = vmatprep.subr.bf16.mxu0 %v729
        %857 = vmatpush1.bf16.msra.mxu0 %v728
        %858 = vmatprep.subr.bf16.mxu0 %v731
        %859 = vmatpush1.bf16.msra.mxu0 %v730
        %860 = vmatprep.subr.bf16.mxu0 %v733
        %861 = vmatpush1.bf16.msra.mxu0 %v732
        %862 = vmatprep.subr.bf16.mxu0 %v735
        %863 = vmatpush1.bf16.msra.mxu0 %v734
        %864 = vmatprep.subr.bf16.mxu0 %v737
        %865 = vmatpush1.bf16.msra.mxu0 %v736
        %866 = vmatprep.subr.bf16.mxu0 %v739
        %867 = vmatpush1.bf16.msra.mxu0 %v738
        %868 = vmatprep.subr.bf16.mxu0 %v741
        %869 = vmatpush1.bf16.msra.mxu0 %v740
        %870 = vmatprep.subr.bf16.mxu0 %v743
        %871 = vmatpush1.bf16.msra.mxu0 %v742
        %872 = vmatprep.mubr.bf16.mxu0 %v513
        %873 = vmatmul.mubr.bf16.gmra.mrb[0].mxu0 %v512
        %v874 = vpop.f32.mrb[0].mxu0
        %v875 = vadd.f32 0.0, %v874
        %v876 = vpop.f32.mrb[0].mxu0
        %v877 = vadd.f32 0.0, %v876
        %v878 = vpop.f32.mrb[0].mxu0
        %v879 = vpop.f32.mrb[0].mxu0
        %880 = vdwg.mxu0
        %881 = vmatprep.subr.bf16.mxu0 %v745
        %882 = vmatpush1.bf16.msra.mxu0 %v744
        %883 = vmatprep.subr.bf16.mxu0 %v747
        %884 = vmatpush1.bf16.msra.mxu0 %v746
        %885 = vmatprep.subr.bf16.mxu0 %v749
        %886 = vmatpush1.bf16.msra.mxu0 %v748
        %887 = vmatprep.subr.bf16.mxu0 %v751
        %888 = vmatpush1.bf16.msra.mxu0 %v750
        %889 = vmatprep.subr.bf16.mxu0 %v753
        %890 = vmatpush1.bf16.msra.mxu0 %v752
        %891 = vmatprep.subr.bf16.mxu0 %v755
        %892 = vmatpush1.bf16.msra.mxu0 %v754
        %893 = vmatprep.subr.bf16.mxu0 %v757
        %894 = vmatpush1.bf16.msra.mxu0 %v756
        %895 = vmatprep.subr.bf16.mxu0 %v759
        %896 = vmatpush1.bf16.msra.mxu0 %v758
        %897 = vmatprep.subr.bf16.mxu0 %v761
        %898 = vmatpush1.bf16.msra.mxu0 %v760
        %899 = vmatprep.subr.bf16.mxu0 %v763
        %900 = vmatpush1.bf16.msra.mxu0 %v762
        %901 = vmatprep.subr.bf16.mxu0 %v765
        %902 = vmatpush1.bf16.msra.mxu0 %v764
        %903 = vmatprep.subr.bf16.mxu0 %v767
        %904 = vmatpush1.bf16.msra.mxu0 %v766
        %905 = vmatprep.subr.bf16.mxu0 %v769
        %906 = vmatpush1.bf16.msra.mxu0 %v768
        %907 = vmatprep.subr.bf16.mxu0 %v771
        %908 = vmatpush1.bf16.msra.mxu0 %v770
        %909 = vmatprep.subr.bf16.mxu0 %v773
        %910 = vmatpush1.bf16.msra.mxu0 %v772
        %911 = vmatprep.subr.bf16.mxu0 %v775
        %912 = vmatpush1.bf16.msra.mxu0 %v774
        %913 = vmatprep.mubr.bf16.mxu0 %v515
        %914 = vmatmul.mubr.bf16.gmra.mrb[0].mxu0 %v514
        %v915 = vpop.f32.mrb[0].mxu0
        %v916 = vadd.f32 %v875, %v915
        %v917 = vpop.f32.mrb[0].mxu0
        %v918 = vadd.f32 %v877, %v917
        %v919 = vpop.f32.mrb[0].mxu0
        %v920 = vpop.f32.mrb[0].mxu0
        %921 = vdwg.mxu0
        %v922 = vld [vmem:[%s1] sm:$0xff]
        %v923 = vld [vmem:[%s407] sm:$0x3]
        %925 = vset.pattern.permute.xlu0 0
        %926 = vperm.xlu0 %925, %v922
        %v927 = vpop.permute.xlu0 %926
        %v930 = vlaneseq
        %v931 = vshrl.u32 %v930, 7
        %v932 = vsub.s32 0, %v931
        %v933 = vrot.slane %v923, %v932
        %v934 = vlaneseq
        %v935 = vshrl.u32 %v934, 7
        %v936 = vsub.s32 1, %v935
        %v937 = vrot.slane %v923, %v936
        %v940 = vmul.f32 %v927, %v933
        %v941 = vmul.f32 %v927, %v937
        %v942 = vmul.f32 %v916, %v940
        %v943 = vmul.f32 %v918, %v941
        %v944 = vld [vmem:[%s416] sm:$0x3]
        %v946 = vlaneseq
        %v947 = vshrl.u32 %v946, 7
        %v948 = vsub.s32 0, %v947
        %v949 = vrot.slane %v944, %v948
        %v950 = vlaneseq
        %v951 = vshrl.u32 %v950, 7
        %v952 = vsub.s32 1, %v951
        %v953 = vrot.slane %v944, %v952
        %v956 = vadd.f32 %v942, %v949
        %v957 = vadd.f32 %v943, %v953
        %s958 = smul.u32 %s27, 2
        %s959 = sadd.s32 %s958, %s28
        %s960 = smul.u32 %s959, 256
        %v961 = vlaneseq
        %v962 = vand.u32 %v961, 127
        %v963 = vadd.s32 %v962, 128
        %v964 = vstv %s960
        %v965 = vadd.s32 %v964, %v962
        %v966 = vadd.s32 %v964, %v963
        %v967 = vld [vmem:[%s2] sm:$0xff]
        %968 = vset.pattern.permute.xlu0 0
        %969 = vperm.xlu0 %968, %v967
        %v970 = vpop.permute.xlu0 %969
        %vm971 = vcmp.eq.s32.totalorder %v965, %v970
        %vm972 = vcmp.eq.s32.totalorder %v966, %v970
        %v973 = vsel %vm971, 22.4, 0.0
        %v974 = vsel %vm972, 22.4, 0.0
        %v975 = vsub.f32 %v956, %v973
        %v976 = vsub.f32 %v957, %v974
        %v977 = vld [vmem:[#allocation2] sm:$0xff]
        %v978 = vmax.f32 %v975, %v976
        %979 = vmax.xlane.f32.xlu0 %v978
        %v980 = vpop.xlane.xlu0 %979
        %v981 = vmax.f32 %v977, %v980
        %v982 = vld [vmem:[#allocation3] sm:$0xff]
        %v983 = vsub.f32 %v977, %v981
        %v984 = vmul.f32 %v983, 1.442695
        %v985 = vpow.pop %v984
        %v986 = vmul.f32 %v982, %v985
        %988 = vset.pattern.permute.xlu0 0
        %989 = vperm.xlu0 %988, %v981
        %v990 = vpop.permute.xlu0 %989
        %v992 = vsub.f32 %v975, %v990
        %v993 = vsub.f32 %v976, %v990
        %v994 = vmul.f32 %v992, 1.442695
        %v995 = vpow.pop %v994
        %v996 = vmul.f32 %v993, 1.442695
        %v997 = vpow.pop %v996
        %v998 = vadd.f32 %v995, %v997
        %999 = vadd.xlane.f32.xlu0 %v998
        %v1000 = vpop.xlane.xlu0 %999
        %v1001 = vadd.f32 %v986, %v1000
        %vm1002 = vcmask 7168
        %1003 = vst.msk [vmem:[#allocation3] sm:$0xff] %vm1002, %v1001
        %1004 = vst.msk [vmem:[#allocation2] sm:$0xff] %vm1002, %v981
        %v1005 = vld [vmem:[#allocation4] sm:$0xff]
        %v1006 = vsel %vm971, %v975, 0.0
        %v1007 = vsel %vm972, %v976, 0.0
        %v1008 = vadd.f32 %v1006, %v1007
        %1009 = vadd.xlane.f32.xlu0 %v1008
        %v1010 = vpop.xlane.xlu0 %1009
        %v1011 = vadd.f32 %v1005, %v1010
        %1012 = vst.msk [vmem:[#allocation4] sm:$0xff] %vm1002, %v1011
        %p1013 = scmp.eq.s32.totalorder %s28, 1
        // Predicated region
        $region53: #{kd_loss_forward.1} parent=43 // pred_check
          %p1014 = pneg %p1013
        $region54: #{kd_loss_forward.1} parent=43 // pred_check_branch
          %1016 = sbr.rel (%p1014) target = $region56
        $region55: #{kd_loss_forward.1} parent=43 // pred_region
          %v1017 = vld [vmem:[#allocation2] sm:$0xff]
          %1018 = vst.msk [vmem:[%s423] sm:$0xff] %vm1002, %v1017
          %v1019 = vld [vmem:[#allocation3] sm:$0xff]
          %1020 = vst.msk [vmem:[%s427] sm:$0xff] %vm1002, %v1019
          %v1021 = vld [vmem:[#allocation4] sm:$0xff]
          %1022 = vst.msk [vmem:[%s431] sm:$0xff] %vm1002, %v1021
        $region56: #{kd_loss_forward.1} parent=43 // pred_fallthru
          _
        %p1023 = scmp.lt.s32.totalorder %s27, 1
        %s1024 = scalar_select %p1023, %s27, 1
        %s1025 = smul.addr %s1024, 8
        %s1026 = scalar_lea.vmem %s6, %s1025
        %p1027 = scmp.lt.s32.totalorder %s27, 1
        %s1028 = scalar_select %p1027, %s27, 1
        %s1029 = smul.addr %s1028, 8
        %s1030 = scalar_lea.vmem %s7, %s1029
        %p1031 = scmp.lt.s32.totalorder %s27, 1
        %s1032 = scalar_select %p1031, %s27, 1
        %s1033 = smul.addr %s1032, 8
        %s1034 = scalar_lea.vmem %s8, %s1033
        // Predicated region
        $region57: #{kd_loss_forward.1} parent=43 // pred_check
          %p1035 = pneg %p206
        $region58: #{kd_loss_forward.1} parent=43 // pred_check_branch
          %1037 = sbr.rel (%p1035) target = $region60
        $region59: #{kd_loss_forward.1} parent=43 // pred_region
          _
        $region60: #{kd_loss_forward.1} parent=43 // pred_fallthru
          _
        // Predicated region
        $region61: #{kd_loss_forward.1} parent=43 // pred_check
          %p1038 = pneg %p232
        $region62: #{kd_loss_forward.1} parent=43 // pred_check_branch
          %1040 = sbr.rel (%p1038) target = $region64
        $region63: #{kd_loss_forward.1} parent=43 // pred_region
          _
        $region64: #{kd_loss_forward.1} parent=43 // pred_fallthru
          _
        // Predicated region
        $region65: #{kd_loss_forward.1} parent=43 // pred_check
          %p1041 = pneg %p258
        $region66: #{kd_loss_forward.1} parent=43 // pred_check_branch
          %1043 = sbr.rel (%p1041) target = $region68
        $region67: #{kd_loss_forward.1} parent=43 // pred_region
          _
        $region68: #{kd_loss_forward.1} parent=43 // pred_fallthru
          _
      $region44: #{kd_loss_forward.1} parent=5 // pred_fallthru
        _
      %p1044 = scmp.le.s32.totalorder 2, %s18
      // Predicated region
      $region69: #{kd_loss_forward.1} parent=5 // pred_check
        %p1045 = pneg %p1044
      $region70: #{kd_loss_forward.1} parent=5 // pred_check_branch
        %1047 = sbr.rel (%p1045) target = $region72
      $region71: #{kd_loss_forward.1} parent=5 // pred_region
        %s1048 = ssub.s32 %s18, 2
        // Predicated region
        $region73: #{kd_loss_forward.1} parent=71 // pred_check
          %p1049 = pneg %p212
        $region74: #{kd_loss_forward.1} parent=71 // pred_check_branch
          %1051 = sbr.rel (%p1049) target = $region76
        $region75: #{kd_loss_forward.1} parent=71 // pred_region
          %p1052 = scmp.lt.s32.totalorder %s29, 1
          %s1053 = scalar_select %p1052, %s29, 1
          %s1054 = smul.addr %s1053, 8
          %s1055 = scalar_lea.vmem %s6, %s1054
        $region76: #{kd_loss_forward.1} parent=71 // pred_fallthru
          _
        // Predicated region
        $region77: #{kd_loss_forward.1} parent=71 // pred_check
          %p1056 = pneg %p238
        $region78: #{kd_loss_forward.1} parent=71 // pred_check_branch
          %1058 = sbr.rel (%p1056) target = $region80
        $region79: #{kd_loss_forward.1} parent=71 // pred_region
          %p1059 = scmp.lt.s32.totalorder %s29, 1
          %s1060 = scalar_select %p1059, %s29, 1
          %s1061 = smul.addr %s1060, 8
          %s1062 = scalar_lea.vmem %s7, %s1061
        $region80: #{kd_loss_forward.1} parent=71 // pred_fallthru
          _
        // Predicated region
        $region81: #{kd_loss_forward.1} parent=71 // pred_check
          %p1063 = pneg %p264
        $region82: #{kd_loss_forward.1} parent=71 // pred_check_branch
          %1065 = sbr.rel (%p1063) target = $region84
        $region83: #{kd_loss_forward.1} parent=71 // pred_region
          %p1066 = scmp.lt.s32.totalorder %s29, 1
          %s1067 = scalar_select %p1066, %s29, 1
          %s1068 = smul.addr %s1067, 8
          %s1069 = scalar_lea.vmem %s8, %s1068
        $region84: #{kd_loss_forward.1} parent=71 // pred_fallthru
          _
      $region72: #{kd_loss_forward.1} parent=5 // pred_fallthru
        _
    $region6: #{kd_loss_forward.1} parent=1 // loop_footer
      %s22 = sadd.s32 1, %s18
    $region7: #{kd_loss_forward.1} parent=1 // loop_footer_branch
      %17 = sbr.rel target = $region3
    $region8: #{kd_loss_forward.1} parent=1 // loop_exit
      _
    %1070 = vsyncpa [#allocation6], 1
    %s1071 = scalar_lea.sflag [#allocation6], 1
    %1072 = vsyncpa %s1071, 1

</llo_original>
